<compile_context>
chip_gen: v5e
topology: v5e:2x2
jax: 0.10.0
libtpu: 0.0.40
codegen_flags: <defaults>
</compile_context>

<pallas_src>
import jax
import jax.numpy as jnp
from jax.experimental import pallas as pl
from jax.experimental.pallas import tpu as pltpu

PARTITIONS = 90
H1 = 30
H2 = 20
NUM_PARTS = 6
_DEFAULT_TM = 4096                 # rows per tile (f32 HBM-roofline sweet spot)
_VMEM_LIMIT_BYTES = 48 * 1024 * 1024


def _round_up(n, m):
    return ((n + m - 1) // m) * m


def _mlp_kernel(x_ref, w1_ref, b1_ref, w2_ref, b2_ref, o_ref):
    # x_ref: [TM, 90]   w1_ref: [90, 30]  b1_ref: [1, 30]  (biases always f32)
    # w2_ref: [30, 20]  b2_ref: [1, 20]   o_ref: [TM, 20]
    x = x_ref[...]
    # MXU matmuls with f32 accumulation; bias-add + tanh in f32 (safe on v5e).
    h = jnp.tanh(
        jnp.dot(x, w1_ref[...], preferred_element_type=jnp.float32) + b1_ref[...]
    )
    h = h.astype(w2_ref.dtype)
    y = jnp.tanh(
        jnp.dot(h, w2_ref[...], preferred_element_type=jnp.float32) + b2_ref[...]
    )
    o_ref[...] = y.astype(o_ref.dtype)


def init_params(key, input_length=PARTITIONS):
    # PyTorch nn.Linear default init: U(-1/sqrt(fan_in), 1/sqrt(fan_in)).
    k1, k2, k3, k4 = jax.random.split(key, 4)
    lim1 = 1.0 / jnp.sqrt(jnp.float32(input_length))
    lim2 = 1.0 / jnp.sqrt(jnp.float32(H1))
    w1 = jax.random.uniform(k1, (input_length, H1), jnp.float32, -lim1, lim1)
    b1 = jax.random.uniform(k2, (1, H1), jnp.float32, -lim1, lim1)
    w2 = jax.random.uniform(k3, (H1, H2), jnp.float32, -lim2, lim2)
    b2 = jax.random.uniform(k4, (1, H2), jnp.float32, -lim2, lim2)
    return (w1, b1, w2, b2)


def _pick_tile(n_rows, tile_m):
    tm = _round_up(max(min(tile_m, n_rows), 8), 8)
    # Once the problem is big enough to split, keep >= 2 grid steps so the
    # "parallel" axis can shard row tiles across v7x's 2 TensorCores and the
    # pipeline has prefetch/compute overlap. Neutral on v5e/v6e.
    if n_rows >= 4096:
        tm = min(tm, _round_up(pl.cdiv(n_rows, 2), 8))
    return tm


def dnn_multilayer_forward(x, params, *, tile_m=_DEFAULT_TM, out_dtype=None):
    """x: [B, 6*PARTITIONS] (f32 or bf16) -> [B, 6*H2] (out_dtype, default x.dtype)."""
    B = x.shape[0]
    assert x.shape[1] == NUM_PARTS * PARTITIONS
    w1, b1, w2, b2 = params
    out_dtype = x.dtype if out_dtype is None else out_dtype

    # Stack the 6 partitions along the batch axis (weights shared across the six
    # branches): [B, 540] -> [B*6, 90]. Bitcast reshape; no HBM copy.
    xs = x.reshape(B * NUM_PARTS, PARTITIONS)
    N = B * NUM_PARTS

    # Weights are ~13 KB: casting them to the activation dtype is negligible.
    # The activations themselves are read in their HBM dtype (no wrapper astype).
    w1c = w1.astype(x.dtype)
    w2c = w2.astype(x.dtype)
    b1f = b1.astype(jnp.float32)
    b2f = b2.astype(jnp.float32)

    tm = _pick_tile(N, tile_m)
    grid = (pl.cdiv(N, tm),)          # no padding: Pallas clips the ragged last block
    row_map = lambda i: (i, 0)
    const_map = lambda i: (0, 0)      # weights/biases stay VMEM-resident across steps

    in_itemsize = jnp.dtype(x.dtype).itemsize
    out_itemsize = jnp.dtype(out_dtype).itemsize
    weight_bytes = ((w1c.size + w2c.size) * in_itemsize
                    + (b1f.size + b2f.size) * 4)
    cost = pl.CostEstimate(
        flops=2 * N * (PARTITIONS * H1 + H1 * H2),
        transcendentals=N * (H1 + H2),
        bytes_accessed=N * (PARTITIONS * in_itemsize + H2 * out_itemsize)
                       + weight_bytes,
    )

    out = pl.pallas_call(
        _mlp_kernel,
        out_shape=jax.ShapeDtypeStruct((N, H2), out_dtype),
        grid=grid,
        in_specs=[
            pl.BlockSpec((tm, PARTITIONS), row_map),
            pl.BlockSpec((PARTITIONS, H1), const_map),
            pl.BlockSpec((1, H1), const_map),
            pl.BlockSpec((H1, H2), const_map),
            pl.BlockSpec((1, H2), const_map),
        ],
        out_specs=pl.BlockSpec((tm, H2), row_map),
        compiler_params=pltpu.CompilerParams(
            # Independent row tiles: lets v7x shard the grid across its 2 TCs.
            dimension_semantics=("parallel",),
            vmem_limit_bytes=_VMEM_LIMIT_BYTES,
        ),
        cost_estimate=cost,
    )(xs, w1c, b1f, w2c, b2f)

    # [B*6, 20] -> [B, 120] (bitcast; == torch.cat([x1..x6], dim=1)).
    return out.reshape(B, NUM_PARTS * H2)


def _reference(x, params):
    w1, b1, w2, b2 = params
    outs = []
    for k in range(NUM_PARTS):
        part = x[:, k * PARTITIONS:(k + 1) * PARTITIONS]
        h = jnp.tanh(part @ w1 + b1)
        outs.append(jnp.tanh(h @ w2 + b2))
    return jnp.concatenate(outs, axis=1)


if __name__ == "__main__":
    key = jax.random.PRNGKey(0)
    kx, kp = jax.random.split(key)

    B = 4
    x = jax.random.normal(kx, (B, NUM_PARTS * PARTITIONS), jnp.float32)
    params = init_params(kp, input_length=PARTITIONS)
    y_ref = _reference(x, params)

    # 1) Default path (tiny batch -> single full tile, f32 in / f32 out).
    y = jax.block_until_ready(dnn_multilayer_forward(x, params))
    assert y.shape == (B, NUM_PARTS * H2), y.shape
    assert jnp.allclose(y, y_ref, atol=1e-5, rtol=1e-5), "f32 mismatch vs reference"

    # 2) Small tile -> multi-step grid with a RAGGED last block (24 rows, tm=16):
    #    exercises the no-pad cdiv grid + clipped final stores on hardware.
    y_tiled = jax.block_until_ready(dnn_multilayer_forward(x, params, tile_m=16))
    assert jnp.allclose(y_tiled, y_ref, atol=1e-5, rtol=1e-5), "ragged-tile mismatch"

    # 3) bf16 activations already resident in HBM: kernel reads bf16 directly
    #    (half the input bytes), f32 accumulation, bf16 output by default.
    y_bf16 = jax.block_until_ready(
        dnn_multilayer_forward(x.astype(jnp.bfloat16), params)
    )
    assert y_bf16.dtype == jnp.bfloat16
    assert jnp.allclose(y_bf16.astype(jnp.float32), y_ref, atol=3e-2, rtol=3e-2), \
        "bf16 mismatch"

    print("KERNEL_OK")
</pallas_src>

<mosaic_0001>
module attributes {stable_mosaic.version = 11 : i64} {
  func.func @_mlp_kernel(%arg0: i32, %arg1: memref<24x90xf32, #tpu.memory_space<vmem>>, %arg2: memref<90x30xf32, #tpu.memory_space<vmem>>, %arg3: memref<1x30xf32, #tpu.memory_space<vmem>>, %arg4: memref<30x20xf32, #tpu.memory_space<vmem>>, %arg5: memref<1x20xf32, #tpu.memory_space<vmem>>, %arg6: memref<24x20xf32, #tpu.memory_space<vmem>>) attributes {dimension_semantics = [#tpu.dimension_semantics<parallel>], iteration_bounds = array<i64: 1>, scalar_prefetch = 0 : i64, scratch_operands = 0 : i64, tpu.core_type = #tpu.core_type<tc>, window_params = [{transform_indices = @transform_0, window_bounds = array<i64: 24, 90>}, {pipeline_mode = #tpu.pipeline_mode<synchronous>, transform_indices = @transform_1, window_bounds = array<i64: 90, 30>}, {pipeline_mode = #tpu.pipeline_mode<synchronous>, transform_indices = @transform_2, window_bounds = array<i64: 1, 30>}, {pipeline_mode = #tpu.pipeline_mode<synchronous>, transform_indices = @transform_3, window_bounds = array<i64: 30, 20>}, {pipeline_mode = #tpu.pipeline_mode<synchronous>, transform_indices = @transform_4, window_bounds = array<i64: 1, 20>}, {transform_indices = @transform_5, window_bounds = array<i64: 24, 20>}]} {
    %c0 = arith.constant 0 : index
    %c0_0 = arith.constant 0 : index
    %0 = vector.load %arg1[%c0, %c0_0] : memref<24x90xf32, #tpu.memory_space<vmem>>, vector<24x90xf32>
    %c0_1 = arith.constant 0 : index
    %c0_2 = arith.constant 0 : index
    %1 = vector.load %arg2[%c0_1, %c0_2] : memref<90x30xf32, #tpu.memory_space<vmem>>, vector<90x30xf32>
    %cst = arith.constant dense<0.000000e+00> : vector<24x30xf32>
    %2 = tpu.matmul %0, %1, %cst {dimension_numbers = #tpu.dot_dimension_numbers<[1], [0], [0], [1], [0, 0, 1, 1], [], []>} : vector<24x90xf32>, vector<90x30xf32>, vector<24x30xf32> -> vector<24x30xf32>
    %c0_3 = arith.constant 0 : index
    %c0_4 = arith.constant 0 : index
    %3 = vector.load %arg3[%c0_3, %c0_4] : memref<1x30xf32, #tpu.memory_space<vmem>>, vector<1x30xf32>
    %4 = vector.broadcast %3 : vector<1x30xf32> to vector<24x30xf32>
    %5 = arith.addf %2, %4 : vector<24x30xf32>
    %6 = math.tanh %5 : vector<24x30xf32>
    %c0_5 = arith.constant 0 : index
    %c0_6 = arith.constant 0 : index
    %7 = vector.load %arg4[%c0_5, %c0_6] : memref<30x20xf32, #tpu.memory_space<vmem>>, vector<30x20xf32>
    %cst_7 = arith.constant dense<0.000000e+00> : vector<24x20xf32>
    %8 = tpu.matmul %6, %7, %cst_7 {dimension_numbers = #tpu.dot_dimension_numbers<[1], [0], [0], [1], [0, 0, 1, 1], [], []>} : vector<24x30xf32>, vector<30x20xf32>, vector<24x20xf32> -> vector<24x20xf32>
    %c0_8 = arith.constant 0 : index
    %c0_9 = arith.constant 0 : index
    %9 = vector.load %arg5[%c0_8, %c0_9] : memref<1x20xf32, #tpu.memory_space<vmem>>, vector<1x20xf32>
    %10 = vector.broadcast %9 : vector<1x20xf32> to vector<24x20xf32>
    %11 = arith.addf %8, %10 : vector<24x20xf32>
    %12 = math.tanh %11 : vector<24x20xf32>
    %c0_10 = arith.constant 0 : index
    %c0_11 = arith.constant 0 : index
    %13 = vector.load %arg6[%c0_10, %c0_11] : memref<24x20xf32, #tpu.memory_space<vmem>>, vector<24x20xf32>
    tpu.vector_store %arg6[%c0_10, %c0_11], %12 {strides = array<i32>} : memref<24x20xf32, #tpu.memory_space<vmem>>, vector<24x20xf32>,
    return
  }
  func.func @transform_0(%arg0: i32) -> (i32, i32) {
    %c0_i32 = arith.constant 0 : i32
    %c0_i32_0 = arith.constant 0 : i32
    return %arg0, %c0_i32 : i32, i32
  }
  func.func @transform_1(%arg0: i32) -> (i32, i32) {
    %c0_i32 = arith.constant 0 : i32
    %c0_i32_0 = arith.constant 0 : i32
    %c0_i32_1 = arith.constant 0 : i32
    return %c0_i32, %c0_i32_0 : i32, i32
  }
  func.func @transform_2(%arg0: i32) -> (i32, i32) {
    %c0_i32 = arith.constant 0 : i32
    %c0_i32_0 = arith.constant 0 : i32
    %c0_i32_1 = arith.constant 0 : i32
    return %c0_i32, %c0_i32_0 : i32, i32
  }
  func.func @transform_3(%arg0: i32) -> (i32, i32) {
    %c0_i32 = arith.constant 0 : i32
    %c0_i32_0 = arith.constant 0 : i32
    %c0_i32_1 = arith.constant 0 : i32
    return %c0_i32, %c0_i32_0 : i32, i32
  }
  func.func @transform_4(%arg0: i32) -> (i32, i32) {
    %c0_i32 = arith.constant 0 : i32
    %c0_i32_0 = arith.constant 0 : i32
    %c0_i32_1 = arith.constant 0 : i32
    return %c0_i32, %c0_i32_0 : i32, i32
  }
  func.func @transform_5(%arg0: i32) -> (i32, i32) {
    %c0_i32 = arith.constant 0 : i32
    %c0_i32_0 = arith.constant 0 : i32
    return %arg0, %c0_i32 : i32, i32
  }
}

</mosaic_0001>

<llo_original>
// kernel: tpu_custom_call.1
$region0: #{tpu_custom_call.1}
  #allocation0 [shape = 'u32[]', space=smem, size = 0x4, offset = 0x4, fixed_abs, tag = 'smem constant byte address 0x4 - core index']
  #allocation1 [shape = 'u32[72,128]{1,0:T(1,128)}', space=vmem, size = 0x9000, scoped, tag = 'internal scratch']
  %s0 = inlined_call_operand.vmem [shape: f32[24,90], index: 0, kind: input, shape index: {}]
  %s1 = inlined_call_operand.vmem [shape: f32[90,30], index: 1, kind: input, shape index: {}]
  %s2 = inlined_call_operand.vmem [shape: f32[1,30], index: 2, kind: input, shape index: {}]
  %s3 = inlined_call_operand.vmem [shape: f32[30,20], index: 3, kind: input, shape index: {}]
  %s4 = inlined_call_operand.vmem [shape: f32[1,20], index: 4, kind: input, shape index: {}]
  %s5 = inlined_call_operand.hbm [shape: f32[24,20], index: 5, kind: output, shape index: {}]
  %s6 = sld [smem:[#allocation0]]
  $region30: #{tpu_custom_call.1} parent=0
    _
  %s8 = ssub.s32 1, %s6
  %s9 = scalar_select 0, %s8, %s6
  $region1: #{tpu_custom_call.1} parent=0
    #allocation2 [shape = 'u8[12288]{0}', space=vmem, size = 0x3000, scoped, tag = 'output window, operand 0, single buffered']
    #allocation3 [shape = 's32[1]{0}', space=sflag, size = 0x4, scoped, tag = 'scoped memory for tpu_custom_call.1']
    %10 = vsyncpa [#allocation3], 0
    // Predicated region
    $region2: #{tpu_custom_call.1} parent=1 // pred_check
      _
    $region3: #{tpu_custom_call.1} parent=1 // pred_check_branch
      %12 = sbr.rel (0) target = $region5
    $region4: #{tpu_custom_call.1} parent=1 // pred_region
      _
    $region5: #{tpu_custom_call.1} parent=1 // pred_fallthru
      _
    // Predicated region
    $region6: #{tpu_custom_call.1} parent=1 // pred_check
      _
    $region7: #{tpu_custom_call.1} parent=1 // pred_check_branch
      %14 = sbr.rel (0) target = $region9
    $region8: #{tpu_custom_call.1} parent=1 // pred_region
      _
    $region9: #{tpu_custom_call.1} parent=1 // pred_fallthru
      _
    // Predicated region
    $region10: #{tpu_custom_call.1} parent=1 // pred_check
      _
    $region11: #{tpu_custom_call.1} parent=1 // pred_check_branch
      %16 = sbr.rel (0) target = $region13
    $region12: #{tpu_custom_call.1} parent=1 // pred_region
      _
    $region13: #{tpu_custom_call.1} parent=1 // pred_fallthru
      _
    // Predicated region
    $region14: #{tpu_custom_call.1} parent=1 // pred_check
      _
    $region15: #{tpu_custom_call.1} parent=1 // pred_check_branch
      %18 = sbr.rel (0) target = $region17
    $region16: #{tpu_custom_call.1} parent=1 // pred_region
      _
    $region17: #{tpu_custom_call.1} parent=1 // pred_fallthru
      _
    // Predicated region
    $region18: #{tpu_custom_call.1} parent=1 // pred_check
      _
    $region19: #{tpu_custom_call.1} parent=1 // pred_check_branch
      %20 = sbr.rel (0) target = $region21
    $region20: #{tpu_custom_call.1} parent=1 // pred_region
      _
    $region21: #{tpu_custom_call.1} parent=1 // pred_fallthru
      _
    %v21 = vld [vmem:[%s0] sm:$0xff]
    %v22 = vld [vmem:[%s0 + $0x8] sm:$0xff]
    %v23 = vld [vmem:[%s0 + $0x10] sm:$0xff]
    %v24 = vld [vmem:[%s1] sm:$0xff]
    %v25 = vld [vmem:[%s1 + $0x8] sm:$0xff]
    %v26 = vld [vmem:[%s1 + $0x10] sm:$0xff]
    %v27 = vld [vmem:[%s1 + $0x18] sm:$0xff]
    %v28 = vld [vmem:[%s1 + $0x20] sm:$0xff]
    %v29 = vld [vmem:[%s1 + $0x28] sm:$0xff]
    %v30 = vld [vmem:[%s1 + $0x30] sm:$0xff]
    %v31 = vld [vmem:[%s1 + $0x38] sm:$0xff]
    %v32 = vld [vmem:[%s1 + $0x40] sm:$0xff]
    %v33 = vld [vmem:[%s1 + $0x48] sm:$0xff]
    %v34 = vld [vmem:[%s1 + $0x50] sm:$0xff]
    %v35 = vld [vmem:[%s1 + $0x58] sm:$0x3]
    %v36 = vld [vmem:[%s2] sm:$0x1]
    %v38 = vperm.slane %v36, 0
    %vm40 = vcmask 736256
    %v42 = vsel %vm40, %v21, 0
    %v45 = vsel %vm40, %v22, 0
    %v48 = vsel %vm40, %v23, 0
    %vm50 = vcmask 1041408
    %v52 = vsel %vm50, %v35, 0
    %54 = vmatpush.msra.mxu0 0.0
    %55 = vmatpush.msra.mxu0 0.0
    %56 = vmatpush.msra.mxu0 0.0
    %57 = vmatpush.msra.mxu0 0.0
    %58 = vmatpush.msra.mxu0 %v52
    %59 = vmatpush.msra.mxu0 %v34
    %60 = vmatpush.msra.mxu0 %v33
    %61 = vmatpush.msra.mxu0 %v32
    %62 = vmatpush.msra.mxu0 %v31
    %63 = vmatpush.msra.mxu0 %v30
    %64 = vmatpush.msra.mxu0 %v29
    %65 = vmatpush.msra.mxu0 %v28
    %66 = vmatpush.msra.mxu0 %v27
    %67 = vmatpush.msra.mxu0 %v26
    %68 = vmatpush.msra.mxu0 %v25
    %69 = vmatpush.msra.mxu0 %v24
    %70 = vmatmul.f32.gmra.mxu0 %v42
    %v71 = vpop.f32.mrf.mxu0
    %v72 = vadd.f32 %v38, %v71
    %73 = vmatmul.f32.gmra.mxu0 %v45
    %v74 = vpop.f32.mrf.mxu0
    %v75 = vadd.f32 %v38, %v74
    %76 = vmatmul.f32.gmra.mxu0 %v48
    %v77 = vpop.f32.mrf.mxu0
    %v78 = vadd.f32 %v38, %v77
    %79 = vdwg.mxu0
    %v80 = vtanh.pop %v72
    %v81 = vtanh.pop %v75
    %v82 = vtanh.pop %v78
    %v83 = vld [vmem:[%s3] sm:$0xff]
    %v84 = vld [vmem:[%s3 + $0x8] sm:$0xff]
    %v85 = vld [vmem:[%s3 + $0x10] sm:$0xff]
    %v86 = vld [vmem:[%s3 + $0x18] sm:$0x3f]
    %v87 = vld [vmem:[%s4] sm:$0x1]
    %v89 = vperm.slane %v87, 0
    %vm91 = vcmask 244736
    %v93 = vsel %vm91, %v80, 0
    %v96 = vsel %vm91, %v81, 0
    %v99 = vsel %vm91, %v82, 0
    %vm101 = vcmask 1045504
    %v103 = vsel %vm101, %v86, 0
    %105 = vmatpush.msra.mxu0 0.0
    %106 = vmatpush.msra.mxu0 0.0
    %107 = vmatpush.msra.mxu0 0.0
    %108 = vmatpush.msra.mxu0 0.0
    %109 = vmatpush.msra.mxu0 0.0
    %110 = vmatpush.msra.mxu0 0.0
    %111 = vmatpush.msra.mxu0 0.0
    %112 = vmatpush.msra.mxu0 0.0
    %113 = vmatpush.msra.mxu0 0.0
    %114 = vmatpush.msra.mxu0 0.0
    %115 = vmatpush.msra.mxu0 0.0
    %116 = vmatpush.msra.mxu0 0.0
    %117 = vmatpush.msra.mxu0 %v103
    %118 = vmatpush.msra.mxu0 %v85
    %119 = vmatpush.msra.mxu0 %v84
    %120 = vmatpush.msra.mxu0 %v83
    %121 = vmatmul.f32.gmra.mxu0 %v93
    %v122 = vpop.f32.mrf.mxu0
    %v123 = vadd.f32 %v89, %v122
    %124 = vmatmul.f32.gmra.mxu0 %v96
    %v125 = vpop.f32.mrf.mxu0
    %v126 = vadd.f32 %v89, %v125
    %127 = vmatmul.f32.gmra.mxu0 %v99
    %v128 = vpop.f32.mrf.mxu0
    %v129 = vadd.f32 %v89, %v128
    %130 = vdwg.mxu0
    %v131 = vtanh.pop %v123
    %v132 = vtanh.pop %v126
    %v133 = vtanh.pop %v129
    %vm134 = vcmask 162816
    %135 = vst.msk [vmem:[#allocation2] sm:$0xff] %vm134, %v131
    %136 = vst.msk [vmem:[#allocation2 + $0x8] sm:$0xff] %vm134, %v132
    %137 = vst.msk [vmem:[#allocation2 + $0x10] sm:$0xff] %vm134, %v133
    // Predicated region
    $region22: #{tpu_custom_call.1} parent=1 // pred_check
      _
    $region23: #{tpu_custom_call.1} parent=1 // pred_check_branch
      %139 = sbr.rel (0) target = $region25
    $region24: #{tpu_custom_call.1} parent=1 // pred_region
      %141 = vsyncadd [#allocation3], 0
      %s142 = sshll.u32 [#allocation2], 4
      %s143 = int_to_ptr.vmem [resolvable:$true] %s142
      %s144 = sshll.u32 %s5, 4
      %s145 = int_to_ptr.hbm [resolvable:$true] %s144
      %150 = dma.vmem_to_hbm [thread:$0]  %s143, 384, %s145, [#allocation3], 128, 128, 8
    $region25: #{tpu_custom_call.1} parent=1 // pred_fallthru
      _
    // Predicated region
    $region26: #{tpu_custom_call.1} parent=1 // pred_check
      _
    $region27: #{tpu_custom_call.1} parent=1 // pred_check_branch
      %152 = sbr.rel (0) target = $region29
    $region28: #{tpu_custom_call.1} parent=1 // pred_region
      %154 = dma.done [#allocation3], 384
    $region29: #{tpu_custom_call.1} parent=1 // pred_fallthru
      _
    %155 = vsyncpa [#allocation3], 1

</llo_original>
